<compile_context>
chip_gen: v5e
topology: v5e:2x2
jax: 0.10.0
libtpu: 0.0.40
codegen_flags: <defaults>
</compile_context>

<pallas_src>
from functools import partial

import jax
import jax.numpy as jnp
from jax import lax
from jax.experimental import pallas as pl
from jax.experimental.pallas import tpu as pltpu


def _double_conv_kernel(xc_ref, xu_ref, xd_ref, w1_ref, b1_ref, w2_ref, b2_ref,
                        o_ref, *, n_row_blocks):
    # xc_ref : (bn, T, W*Cin)       current row block (f32)
    # xu_ref : (bn, T, W*Cin)       previous row block (clamped at the top edge)
    # xd_ref : (bn, T, W*Cin)       next row block (clamped at the bottom edge)
    # w1_ref : (3*W*Cin, W*Cout)    banded conv1 weights (BN1 scale folded in)
    # w2_ref : (3*W*Cout, W*Cout)   banded conv2 weights (BN2 scale folded in)
    # b*_ref : (1, W*Cout)          folded BN bias, pre-tiled over W (f32)
    # o_ref  : (bn, T, W*Cout)      lane-dense output block
    r = pl.program_id(1)
    bn, T, WCi = xc_ref.shape
    WCo = o_ref.shape[-1]
    cdt = w1_ref.dtype                              # MXU compute dtype (bf16 or f32)

    # Scalar edge masks: halo rows outside the image are zero (SAME padding).
    mask_top = (r > 0).astype(jnp.float32)
    mask_bot = (r < n_row_blocks - 1).astype(jnp.float32)

    # Input rows [r*T-2, r*T+T+2): current block plus a 2-row halo on each side.
    top = xu_ref[:, T - 2:T, :] * mask_top          # (bn, 2, W*Cin)
    bot = xd_ref[:, 0:2, :] * mask_bot              # (bn, 2, W*Cin)
    xe = jnp.concatenate([top, xc_ref[...], bot], axis=1).astype(cdt)  # (bn, T+4, W*Cin)

    # ---- conv1 + BN1 + ReLU: one banded matmul over rows r*T-1 .. r*T+T ----
    a1 = jnp.concatenate([xe[:, 0:T + 2], xe[:, 1:T + 3], xe[:, 2:T + 4]],
                         axis=-1)                   # (bn, T+2, 3*W*Cin)
    h = jnp.dot(a1.reshape(bn * (T + 2), 3 * WCi), w1_ref[...],
                preferred_element_type=jnp.float32)  # (bn*(T+2), W*Cout)
    h = jnp.maximum(h + b1_ref[...], 0.0)            # lane-dense epilogue
    h3 = h.reshape(bn, T + 2, WCo)

    # conv1-output halo rows that fall outside the image act as conv2 zero padding.
    ht = h3[:, 0:1, :] * mask_top
    hb = h3[:, T + 1:T + 2, :] * mask_bot
    he = jnp.concatenate([ht, h3[:, 1:T + 1, :], hb], axis=1).astype(cdt)  # (bn, T+2, W*Cout)

    # ---- conv2 + BN2 + ReLU ----
    a2 = jnp.concatenate([he[:, 0:T], he[:, 1:T + 1], he[:, 2:T + 2]],
                         axis=-1)                   # (bn, T, 3*W*Cout)
    y = jnp.dot(a2.reshape(bn * T, 3 * WCo), w2_ref[...],
                preferred_element_type=jnp.float32)  # (bn*T, W*Cout)
    y = jnp.maximum(y + b2_ref[...], 0.0)
    o_ref[...] = y.reshape(bn, T, WCo).astype(o_ref.dtype)


def _banded_weight(w_hwio, scale, W):
    """Build the banded conv-as-matmul weight (3*W*Cin, W*Cout) with BN scale folded."""
    _, _, cin, cout = w_hwio.shape
    w = w_hwio * scale[None, None, None, :]
    dy = jnp.arange(3)[:, None, None, None, None]
    xi = jnp.arange(W)[None, :, None, None, None]
    ci = jnp.arange(cin)[None, None, :, None, None]
    xo = jnp.arange(W)[None, None, None, :, None]
    co = jnp.arange(cout)[None, None, None, None, :]
    dx = xi - xo + 1
    valid = (dx >= 0) & (dx <= 2)
    gathered = w[dy, jnp.clip(dx, 0, 2), ci, co]          # (3, W, Cin, W, Cout)
    B = jnp.where(valid, gathered, 0.0)
    return B.reshape(3 * W * cin, W * cout)


@partial(jax.jit, static_argnames=("tile_h", "images_per_step", "compute_dtype"))
def double_conv_pallas(x_nchw, w1_oihw, g1, be1, m1, v1, w2_oihw, g2, be2, m2, v2,
                       eps=1e-5, *, tile_h=None, images_per_step=1,
                       compute_dtype=jnp.bfloat16):
    """PyTorch DoubleConv forward (inference-mode BN).  x_nchw: (N, Cin, H, W);
    w*_oihw: (Cout, Cin/Cout, 3, 3); g/be/m/v: BatchNorm gamma/beta/mean/var (Cout,)."""
    N, Cin, H, W = x_nchw.shape
    Cout = w1_oihw.shape[0]
    if tile_h is None:
        tile_h = 8 if (H % 8 == 0 and H > 8) else H
    assert H % tile_h == 0, "H must be divisible by tile_h"
    bn = images_per_step
    assert N % bn == 0, "N must be divisible by images_per_step"
    R = H // tile_h

    # Fold inference BatchNorm into per-channel scale/bias; scale goes into the weights.
    s1 = g1 / jnp.sqrt(v1 + eps)
    s2 = g2 / jnp.sqrt(v2 + eps)
    bias1 = jnp.tile(be1 - m1 * s1, W)[None, :].astype(jnp.float32)   # (1, W*Cout)
    bias2 = jnp.tile(be2 - m2 * s2, W)[None, :].astype(jnp.float32)
    w1_hwio = jnp.transpose(w1_oihw, (2, 3, 1, 0))
    w2_hwio = jnp.transpose(w2_oihw, (2, 3, 1, 0))
    B1 = _banded_weight(w1_hwio, s1, W).astype(compute_dtype)         # (3*W*Cin,  W*Cout)
    B2 = _banded_weight(w2_hwio, s2, W).astype(compute_dtype)         # (3*W*Cout, W*Cout)

    # Lane-dense input layout: merge W with channels on the last (lane) axis.
    x = jnp.transpose(x_nchw, (0, 2, 3, 1)).reshape(N, H, W * Cin).astype(jnp.float32)

    kernel = partial(_double_conv_kernel, n_row_blocks=R)
    out = pl.pallas_call(
        kernel,
        out_shape=jax.ShapeDtypeStruct((N, H, W * Cout), jnp.float32),
        grid=(N // bn, R),
        in_specs=[
            pl.BlockSpec((bn, tile_h, W * Cin), lambda n, r: (n, r, 0)),
            pl.BlockSpec((bn, tile_h, W * Cin),
                         lambda n, r: (n, jnp.maximum(r - 1, 0), 0)),
            pl.BlockSpec((bn, tile_h, W * Cin),
                         lambda n, r: (n, jnp.minimum(r + 1, R - 1), 0)),
            pl.BlockSpec((3 * W * Cin, W * Cout), lambda n, r: (0, 0)),
            pl.BlockSpec((1, W * Cout), lambda n, r: (0, 0)),
            pl.BlockSpec((3 * W * Cout, W * Cout), lambda n, r: (0, 0)),
            pl.BlockSpec((1, W * Cout), lambda n, r: (0, 0)),
        ],
        out_specs=pl.BlockSpec((bn, tile_h, W * Cout), lambda n, r: (n, r, 0)),
        compiler_params=pltpu.CompilerParams(
            dimension_semantics=("parallel", "parallel")),
    )(x, x, x, B1, bias1, B2, bias2)

    out = out.reshape(N, H, W, Cout)
    return jnp.transpose(out, (0, 3, 1, 2))                           # back to NCHW


def _ref_double_conv(x, w1, g1, be1, m1, v1, w2, g2, be2, m2, v2, eps=1e-5):
    """Pure-JAX reference matching PyTorch (inference-mode BN)."""
    def bn(y, g, b, m, v):
        inv = g / jnp.sqrt(v + eps)
        return y * inv[None, :, None, None] + (b - m * inv)[None, :, None, None]
    dn = ('NCHW', 'OIHW', 'NCHW')
    y = lax.conv_general_dilated(x, w1, (1, 1), 'SAME', dimension_numbers=dn,
                                 precision=lax.Precision.HIGHEST)
    y = jnp.maximum(bn(y, g1, be1, m1, v1), 0.0)
    y = lax.conv_general_dilated(y, w2, (1, 1), 'SAME', dimension_numbers=dn,
                                 precision=lax.Precision.HIGHEST)
    y = jnp.maximum(bn(y, g2, be2, m2, v2), 0.0)
    return y


if __name__ == "__main__":
    key = jax.random.PRNGKey(0)
    ks = jax.random.split(key, 11)

    N, Cin, Cout, H, W = 2, 4, 8, 16, 16

    x = jax.random.normal(ks[0], (N, Cin, H, W), jnp.float32)
    w1 = jax.random.normal(ks[1], (Cout, Cin, 3, 3), jnp.float32) * 0.2
    w2 = jax.random.normal(ks[2], (Cout, Cout, 3, 3), jnp.float32) * 0.2
    g1 = 1.0 + 0.1 * jax.random.normal(ks[3], (Cout,), jnp.float32)
    be1 = 0.1 * jax.random.normal(ks[4], (Cout,), jnp.float32)
    m1 = 0.05 * jax.random.normal(ks[5], (Cout,), jnp.float32)
    v1 = jnp.abs(1.0 + 0.1 * jax.random.normal(ks[6], (Cout,), jnp.float32))
    g2 = 1.0 + 0.1 * jax.random.normal(ks[7], (Cout,), jnp.float32)
    be2 = 0.1 * jax.random.normal(ks[8], (Cout,), jnp.float32)
    m2 = 0.05 * jax.random.normal(ks[9], (Cout,), jnp.float32)
    v2 = jnp.abs(1.0 + 0.1 * jax.random.normal(ks[10], (Cout,), jnp.float32))

    ref = jax.block_until_ready(
        _ref_double_conv(x, w1, g1, be1, m1, v1, w2, g2, be2, m2, v2))

    # Config 1 (default): bf16 MXU inputs, 8-row blocks, 1 image/step -> grid (2, 2).
    out = double_conv_pallas(x, w1, g1, be1, m1, v1, w2, g2, be2, m2, v2)
    out = jax.block_until_ready(out)
    assert out.shape == (N, Cout, H, W)
    assert jnp.allclose(out, ref, atol=5e-2, rtol=5e-2), \
        f"bf16 path: max abs err {jnp.max(jnp.abs(out - ref))}"

    # Config 2: f32 MXU inputs, whole image, 2 images/step -> grid (1, 1).
    out2 = double_conv_pallas(x, w1, g1, be1, m1, v1, w2, g2, be2, m2, v2,
                              tile_h=16, images_per_step=2,
                              compute_dtype=jnp.float32)
    out2 = jax.block_until_ready(out2)
    assert jnp.allclose(out2, ref, atol=2e-3, rtol=2e-3), \
        f"f32 path: max abs err {jnp.max(jnp.abs(out2 - ref))}"

    print("KERNEL_OK")
</pallas_src>

<mosaic_0001>
module attributes {stable_mosaic.version = 11 : i64} {
  func.func @_double_conv_kernel(%arg0: i32, %arg1: i32, %arg2: memref<1x8x64xf32, #tpu.memory_space<vmem>>, %arg3: memref<1x8x64xf32, #tpu.memory_space<vmem>>, %arg4: memref<1x8x64xf32, #tpu.memory_space<vmem>>, %arg5: memref<192x128xbf16, #tpu.memory_space<vmem>>, %arg6: memref<1x128xf32, #tpu.memory_space<vmem>>, %arg7: memref<384x128xbf16, #tpu.memory_space<vmem>>, %arg8: memref<1x128xf32, #tpu.memory_space<vmem>>, %arg9: memref<1x8x128xf32, #tpu.memory_space<vmem>>) attributes {dimension_semantics = [#tpu.dimension_semantics<parallel>, #tpu.dimension_semantics<parallel>], iteration_bounds = array<i64: 2, 2>, scalar_prefetch = 0 : i64, scratch_operands = 0 : i64, tpu.core_type = #tpu.core_type<tc>, window_params = [{transform_indices = @transform_0, window_bounds = array<i64: 1, 8, 64>}, {transform_indices = @transform_1, window_bounds = array<i64: 1, 8, 64>}, {transform_indices = @transform_2, window_bounds = array<i64: 1, 8, 64>}, {pipeline_mode = #tpu.pipeline_mode<synchronous>, transform_indices = @transform_3, window_bounds = array<i64: 192, 128>}, {pipeline_mode = #tpu.pipeline_mode<synchronous>, transform_indices = @transform_4, window_bounds = array<i64: 1, 128>}, {pipeline_mode = #tpu.pipeline_mode<synchronous>, transform_indices = @transform_5, window_bounds = array<i64: 384, 128>}, {pipeline_mode = #tpu.pipeline_mode<synchronous>, transform_indices = @transform_6, window_bounds = array<i64: 1, 128>}, {transform_indices = @transform_7, window_bounds = array<i64: 1, 8, 128>}]} {
    %c0_i32 = arith.constant 0 : i32
    %0 = arith.cmpi sgt, %arg1, %c0_i32 : i32
    %1 = arith.extui %0 : i1 to i32
    %2 = arith.sitofp %1 : i32 to f32
    %c1_i32 = arith.constant 1 : i32
    %3 = arith.cmpi slt, %arg1, %c1_i32 : i32
    %4 = arith.extui %3 : i1 to i32
    %5 = arith.sitofp %4 : i32 to f32
    %c0 = arith.constant 0 : index
    %c6 = arith.constant 6 : index
    %c0_0 = arith.constant 0 : index
    %6 = vector.load %arg3[%c0, %c6, %c0_0] : memref<1x8x64xf32, #tpu.memory_space<vmem>>, vector<1x2x64xf32>
    %7 = vector.broadcast %2 : f32 to vector<1x2x64xf32>
    %8 = arith.mulf %6, %7 : vector<1x2x64xf32>
    %c0_1 = arith.constant 0 : index
    %c0_2 = arith.constant 0 : index
    %c0_3 = arith.constant 0 : index
    %9 = vector.load %arg4[%c0_1, %c0_2, %c0_3] : memref<1x8x64xf32, #tpu.memory_space<vmem>>, vector<1x2x64xf32>
    %10 = vector.broadcast %5 : f32 to vector<1x2x64xf32>
    %11 = arith.mulf %9, %10 : vector<1x2x64xf32>
    %c0_4 = arith.constant 0 : index
    %c0_5 = arith.constant 0 : index
    %c0_6 = arith.constant 0 : index
    %12 = vector.load %arg2[%c0_4, %c0_5, %c0_6] : memref<1x8x64xf32, #tpu.memory_space<vmem>>, vector<1x8x64xf32>
    %13 = tpu.concatenate %8, %12, %11 in 1 : vector<1x2x64xf32>, vector<1x8x64xf32>, vector<1x2x64xf32> -> vector<1x12x64xf32>
    %14 = arith.truncf %13 : vector<1x12x64xf32> to vector<1x12x64xbf16>
    %15 = vector.extract_strided_slice %14 {offsets = [0, 0, 0], sizes = [1, 10, 64], strides = [1, 1, 1]} : vector<1x12x64xbf16> to vector<1x10x64xbf16>
    %16 = vector.extract_strided_slice %14 {offsets = [0, 1, 0], sizes = [1, 10, 64], strides = [1, 1, 1]} : vector<1x12x64xbf16> to vector<1x10x64xbf16>
    %17 = vector.extract_strided_slice %14 {offsets = [0, 2, 0], sizes = [1, 10, 64], strides = [1, 1, 1]} : vector<1x12x64xbf16> to vector<1x10x64xbf16>
    %18 = tpu.concatenate %15, %16, %17 in 2 : vector<1x10x64xbf16>, vector<1x10x64xbf16>, vector<1x10x64xbf16> -> vector<1x10x192xbf16>
    %19 = vector.shape_cast %18 : vector<1x10x192xbf16> to vector<10x192xbf16>
    %c0_7 = arith.constant 0 : index
    %c0_8 = arith.constant 0 : index
    %20 = vector.load %arg5[%c0_7, %c0_8] : memref<192x128xbf16, #tpu.memory_space<vmem>>, vector<192x128xbf16>
    %cst = arith.constant dense<0.000000e+00> : vector<10x128xf32>
    %21 = tpu.matmul %19, %20, %cst {dimension_numbers = #tpu.dot_dimension_numbers<[1], [0], [0], [1], [0, 0, 1, 1], [], []>} : vector<10x192xbf16>, vector<192x128xbf16>, vector<10x128xf32> -> vector<10x128xf32>
    %c0_9 = arith.constant 0 : index
    %c0_10 = arith.constant 0 : index
    %22 = vector.load %arg6[%c0_9, %c0_10] : memref<1x128xf32, #tpu.memory_space<vmem>>, vector<1x128xf32>
    %23 = vector.broadcast %22 : vector<1x128xf32> to vector<10x128xf32>
    %24 = arith.addf %21, %23 : vector<10x128xf32>
    %cst_11 = arith.constant 0.000000e+00 : f32
    %25 = vector.broadcast %cst_11 : f32 to vector<10x128xf32>
    %26 = arith.maximumf %24, %25 : vector<10x128xf32>
    %27 = vector.shape_cast %26 : vector<10x128xf32> to vector<1x10x128xf32>
    %28 = vector.extract_strided_slice %27 {offsets = [0, 0, 0], sizes = [1, 1, 128], strides = [1, 1, 1]} : vector<1x10x128xf32> to vector<1x1x128xf32>
    %29 = vector.broadcast %2 : f32 to vector<1x1x128xf32>
    %30 = arith.mulf %28, %29 : vector<1x1x128xf32>
    %31 = vector.extract_strided_slice %27 {offsets = [0, 9, 0], sizes = [1, 1, 128], strides = [1, 1, 1]} : vector<1x10x128xf32> to vector<1x1x128xf32>
    %32 = vector.broadcast %5 : f32 to vector<1x1x128xf32>
    %33 = arith.mulf %31, %32 : vector<1x1x128xf32>
    %34 = vector.extract_strided_slice %27 {offsets = [0, 1, 0], sizes = [1, 8, 128], strides = [1, 1, 1]} : vector<1x10x128xf32> to vector<1x8x128xf32>
    %35 = tpu.concatenate %30, %34, %33 in 1 : vector<1x1x128xf32>, vector<1x8x128xf32>, vector<1x1x128xf32> -> vector<1x10x128xf32>
    %36 = arith.truncf %35 : vector<1x10x128xf32> to vector<1x10x128xbf16>
    %37 = vector.extract_strided_slice %36 {offsets = [0, 0, 0], sizes = [1, 8, 128], strides = [1, 1, 1]} : vector<1x10x128xbf16> to vector<1x8x128xbf16>
    %38 = vector.extract_strided_slice %36 {offsets = [0, 1, 0], sizes = [1, 8, 128], strides = [1, 1, 1]} : vector<1x10x128xbf16> to vector<1x8x128xbf16>
    %39 = vector.extract_strided_slice %36 {offsets = [0, 2, 0], sizes = [1, 8, 128], strides = [1, 1, 1]} : vector<1x10x128xbf16> to vector<1x8x128xbf16>
    %40 = tpu.concatenate %37, %38, %39 in 2 : vector<1x8x128xbf16>, vector<1x8x128xbf16>, vector<1x8x128xbf16> -> vector<1x8x384xbf16>
    %41 = vector.shape_cast %40 : vector<1x8x384xbf16> to vector<8x384xbf16>
    %c0_12 = arith.constant 0 : index
    %c0_13 = arith.constant 0 : index
    %42 = vector.load %arg7[%c0_12, %c0_13] : memref<384x128xbf16, #tpu.memory_space<vmem>>, vector<384x128xbf16>
    %cst_14 = arith.constant dense<0.000000e+00> : vector<8x128xf32>
    %43 = tpu.matmul %41, %42, %cst_14 {dimension_numbers = #tpu.dot_dimension_numbers<[1], [0], [0], [1], [0, 0, 1, 1], [], []>} : vector<8x384xbf16>, vector<384x128xbf16>, vector<8x128xf32> -> vector<8x128xf32>
    %c0_15 = arith.constant 0 : index
    %c0_16 = arith.constant 0 : index
    %44 = vector.load %arg8[%c0_15, %c0_16] : memref<1x128xf32, #tpu.memory_space<vmem>>, vector<1x128xf32>
    %45 = vector.broadcast %44 : vector<1x128xf32> to vector<8x128xf32>
    %46 = arith.addf %43, %45 : vector<8x128xf32>
    %cst_17 = arith.constant 0.000000e+00 : f32
    %47 = vector.broadcast %cst_17 : f32 to vector<8x128xf32>
    %48 = arith.maximumf %46, %47 : vector<8x128xf32>
    %49 = vector.shape_cast %48 : vector<8x128xf32> to vector<1x8x128xf32>
    %c0_18 = arith.constant 0 : index
    %c0_19 = arith.constant 0 : index
    %c0_20 = arith.constant 0 : index
    %50 = vector.load %arg9[%c0_18, %c0_19, %c0_20] : memref<1x8x128xf32, #tpu.memory_space<vmem>>, vector<1x8x128xf32>
    tpu.vector_store %arg9[%c0_18, %c0_19, %c0_20], %49 {strides = array<i32>} : memref<1x8x128xf32, #tpu.memory_space<vmem>>, vector<1x8x128xf32>,
    return
  }
  func.func @transform_0(%arg0: i32, %arg1: i32) -> (i32, i32, i32) {
    %c0_i32 = arith.constant 0 : i32
    %c0_i32_0 = arith.constant 0 : i32
    return %arg0, %arg1, %c0_i32 : i32, i32, i32
  }
  func.func @transform_1(%arg0: i32, %arg1: i32) -> (i32, i32, i32) {
    %c1_i32 = arith.constant 1 : i32
    %0 = arith.subi %arg1, %c1_i32 : i32
    %c0_i32 = arith.constant 0 : i32
    %1 = arith.maxsi %0, %c0_i32 : i32
    %c0_i32_0 = arith.constant 0 : i32
    %c0_i32_1 = arith.constant 0 : i32
    return %arg0, %1, %c0_i32_0 : i32, i32, i32
  }
  func.func @transform_2(%arg0: i32, %arg1: i32) -> (i32, i32, i32) {
    %c1_i32 = arith.constant 1 : i32
    %0 = arith.addi %arg1, %c1_i32 : i32
    %c1_i32_0 = arith.constant 1 : i32
    %1 = arith.minsi %0, %c1_i32_0 : i32
    %c0_i32 = arith.constant 0 : i32
    %c0_i32_1 = arith.constant 0 : i32
    return %arg0, %1, %c0_i32 : i32, i32, i32
  }
  func.func @transform_3(%arg0: i32, %arg1: i32) -> (i32, i32) {
    %c0_i32 = arith.constant 0 : i32
    %c0_i32_0 = arith.constant 0 : i32
    %c0_i32_1 = arith.constant 0 : i32
    return %c0_i32, %c0_i32_0 : i32, i32
  }
  func.func @transform_4(%arg0: i32, %arg1: i32) -> (i32, i32) {
    %c0_i32 = arith.constant 0 : i32
    %c0_i32_0 = arith.constant 0 : i32
    %c0_i32_1 = arith.constant 0 : i32
    return %c0_i32, %c0_i32_0 : i32, i32
  }
  func.func @transform_5(%arg0: i32, %arg1: i32) -> (i32, i32) {
    %c0_i32 = arith.constant 0 : i32
    %c0_i32_0 = arith.constant 0 : i32
    %c0_i32_1 = arith.constant 0 : i32
    return %c0_i32, %c0_i32_0 : i32, i32
  }
  func.func @transform_6(%arg0: i32, %arg1: i32) -> (i32, i32) {
    %c0_i32 = arith.constant 0 : i32
    %c0_i32_0 = arith.constant 0 : i32
    %c0_i32_1 = arith.constant 0 : i32
    return %c0_i32, %c0_i32_0 : i32, i32
  }
  func.func @transform_7(%arg0: i32, %arg1: i32) -> (i32, i32, i32) {
    %c0_i32 = arith.constant 0 : i32
    %c0_i32_0 = arith.constant 0 : i32
    return %arg0, %arg1, %c0_i32 : i32, i32, i32
  }
}

</mosaic_0001>

<llo_original>
// kernel: tile.13
$region0: #{tile.13}
  #allocation0 [shape = 's32[1]{0}', space=sflag, size = 0x4, scoped, tag = 'scoped memory for tile.13']
  %s0 = inlined_call_operand.vmem [shape: f32[8], index: 0, kind: input, shape index: {}]
  %s1 = inlined_call_operand.vmem [shape: f32[16,8], index: 1, kind: output, shape index: {}]
  // Predicated region
  $region2: #{tile.13} parent=0 // pred_check
    _
  $region3: #{tile.13} parent=0 // pred_check_branch
    %3 = sbr.rel (0) target = $region5
  $region4: #{tile.13} parent=0 // pred_region
    _
  $region5: #{tile.13} parent=0 // pred_fallthru
    _
  %v4 = vld [vmem:[%s0] ss:$0 sm:$0xff]
  %5 = vst [vmem:[%s1] sm:$0xff] %v4
  %s6 = scalar_lea.vmem %s1, 8
  %7 = vst [vmem:[%s6] sm:$0xff] %v4

// kernel: tile.14
$region0: #{tile.14}
  %s0 = inlined_call_operand.vmem [shape: f32[16,8], index: 0, kind: input, shape index: {}]
  %s1 = inlined_call_operand.vmem [shape: f32[1,128], index: 1, kind: output, shape index: {}]
  $region1: #{tile.14} parent=0
    #allocation0 [shape = 'u8[4096]{0}', space=vmem, size = 0x1000, scoped, tag = 'scoped mem for output reshape']
    %v2 = vld [vmem:[%s0] sm:$0x1]
    %vm3 = vcmask 64512
    %4 = vst.msk [vmem:[#allocation0] sm:$0x1] %vm3, %v2
    %s5 = scalar_lea.vmem %s0, 15
    %v6 = vld [vmem:[%s5] sm:$0x1]
    %7 = vrot.lane.b32.xlu0 %v6, 120
    %v8 = vpop.permute.xlu0 %7
    %vm9 = vcmask 1048512
    %10 = vst.msk [vmem:[#allocation0] sm:$0x1] %vm9, %v8
    %s11 = scalar_lea.vmem %s0, 14
    %v12 = vld [vmem:[%s11] sm:$0x1]
    %13 = vrot.lane.b32.xlu0 %v12, 112
    %v14 = vpop.permute.xlu0 %13
    %vm15 = vcmask 982912
    %16 = vst.msk [vmem:[#allocation0] sm:$0x1] %vm15, %v14
    %s17 = scalar_lea.vmem %s0, 13
    %v18 = vld [vmem:[%s17] sm:$0x1]
    %19 = vrot.lane.b32.xlu0 %v18, 104
    %v20 = vpop.permute.xlu0 %19
    %vm21 = vcmask 917312
    %22 = vst.msk [vmem:[#allocation0] sm:$0x1] %vm21, %v20
    %s23 = scalar_lea.vmem %s0, 12
    %v24 = vld [vmem:[%s23] sm:$0x1]
    %25 = vrot.lane.b32.xlu0 %v24, 96
    %v26 = vpop.permute.xlu0 %25
    %vm27 = vcmask 851712
    %28 = vst.msk [vmem:[#allocation0] sm:$0x1] %vm27, %v26
    %s29 = scalar_lea.vmem %s0, 11
    %v30 = vld [vmem:[%s29] sm:$0x1]
    %31 = vrot.lane.b32.xlu0 %v30, 88
    %v32 = vpop.permute.xlu0 %31
    %vm33 = vcmask 786112
    %34 = vst.msk [vmem:[#allocation0] sm:$0x1] %vm33, %v32
    %s35 = scalar_lea.vmem %s0, 10
    %v36 = vld [vmem:[%s35] sm:$0x1]
    %37 = vrot.lane.b32.xlu0 %v36, 80
    %v38 = vpop.permute.xlu0 %37
    %vm39 = vcmask 720512
    %40 = vst.msk [vmem:[#allocation0] sm:$0x1] %vm39, %v38
    %s41 = scalar_lea.vmem %s0, 9
    %v42 = vld [vmem:[%s41] sm:$0x1]
    %43 = vrot.lane.b32.xlu0 %v42, 72
    %v44 = vpop.permute.xlu0 %43
    %vm45 = vcmask 654912
    %46 = vst.msk [vmem:[#allocation0] sm:$0x1] %vm45, %v44
    %s47 = scalar_lea.vmem %s0, 8
    %v48 = vld [vmem:[%s47] sm:$0x1]
    %49 = vrot.lane.b32.xlu0 %v48, 64
    %v50 = vpop.permute.xlu0 %49
    %vm51 = vcmask 589312
    %52 = vst.msk [vmem:[#allocation0] sm:$0x1] %vm51, %v50
    %s53 = scalar_lea.vmem %s0, 7
    %v54 = vld [vmem:[%s53] sm:$0x1]
    %55 = vrot.lane.b32.xlu0 %v54, 56
    %v56 = vpop.permute.xlu0 %55
    %vm57 = vcmask 523712
    %58 = vst.msk [vmem:[#allocation0] sm:$0x1] %vm57, %v56
    %s59 = scalar_lea.vmem %s0, 6
    %v60 = vld [vmem:[%s59] sm:$0x1]
    %61 = vrot.lane.b32.xlu0 %v60, 48
    %v62 = vpop.permute.xlu0 %61
    %vm63 = vcmask 458112
    %64 = vst.msk [vmem:[#allocation0] sm:$0x1] %vm63, %v62
    %s65 = scalar_lea.vmem %s0, 5
    %v66 = vld [vmem:[%s65] sm:$0x1]
    %67 = vrot.lane.b32.xlu0 %v66, 40
    %v68 = vpop.permute.xlu0 %67
    %vm69 = vcmask 392512
    %70 = vst.msk [vmem:[#allocation0] sm:$0x1] %vm69, %v68
    %s71 = scalar_lea.vmem %s0, 4
    %v72 = vld [vmem:[%s71] sm:$0x1]
    %73 = vrot.lane.b32.xlu0 %v72, 32
    %v74 = vpop.permute.xlu0 %73
    %vm75 = vcmask 326912
    %76 = vst.msk [vmem:[#allocation0] sm:$0x1] %vm75, %v74
    %s77 = scalar_lea.vmem %s0, 3
    %v78 = vld [vmem:[%s77] sm:$0x1]
    %79 = vrot.lane.b32.xlu0 %v78, 24
    %v80 = vpop.permute.xlu0 %79
    %vm81 = vcmask 261312
    %82 = vst.msk [vmem:[#allocation0] sm:$0x1] %vm81, %v80
    %s83 = scalar_lea.vmem %s0, 2
    %v84 = vld [vmem:[%s83] sm:$0x1]
    %85 = vrot.lane.b32.xlu0 %v84, 16
    %v86 = vpop.permute.xlu0 %85
    %vm87 = vcmask 195712
    %88 = vst.msk [vmem:[#allocation0] sm:$0x1] %vm87, %v86
    %s89 = scalar_lea.vmem %s0, 1
    %v90 = vld [vmem:[%s89] sm:$0x1]
    %91 = vrot.lane.b32.xlu0 %v90, 8
    %v92 = vpop.permute.xlu0 %91
    %vm93 = vcmask 130112
    %94 = vst.msk [vmem:[#allocation0] sm:$0x1] %vm93, %v92
    %s96 = ssub.s32 2, 1
    %v97 = vld [vmem:[#allocation0] sm:%s96]
    %s99 = ssub.s32 2, 1
    %100 = vst [vmem:[%s1] sm:%s99] %v97

// kernel: double_conv_pallas.1
$region0: #{double_conv_pallas.1}
  #allocation0 [shape = 'u32[]', space=smem, size = 0x4, offset = 0x4, fixed_abs, tag = 'smem constant byte address 0x4 - core index']
  #allocation1 [shape = 'u32[72,128]{1,0:T(1,128)}', space=vmem, size = 0x9000, scoped, tag = 'internal scratch']
  %s0 = inlined_call_operand.vmem [shape: f32[2,16,64], index: 0, kind: input, shape index: {}, may-alias: {0,1,2}]
  %s1 = inlined_call_operand.vmem [shape: f32[2,16,64], index: 1, kind: input, shape index: {}, may-alias: {0,1,2}]
  %s2 = inlined_call_operand.vmem [shape: f32[2,16,64], index: 2, kind: input, shape index: {}, may-alias: {0,1,2}]
  %s3 = inlined_call_operand.vmem [shape: bf16[192,128], index: 3, kind: input, shape index: {}]
  %s4 = inlined_call_operand.vmem [shape: f32[1,128], index: 4, kind: input, shape index: {}]
  %s5 = inlined_call_operand.vmem [shape: bf16[384,128], index: 5, kind: input, shape index: {}]
  %s6 = inlined_call_operand.vmem [shape: f32[1,128], index: 6, kind: input, shape index: {}]
  %s7 = inlined_call_operand.vmem [shape: f32[2,16,128], index: 7, kind: output, shape index: {}]
  %s8 = sld [smem:[#allocation0]]
  $region61: #{double_conv_pallas.1} parent=0
    _
  %s10 = ssub.s32 1, %s8
  %s11 = scalar_select 0, %s10, %s8
  loop: start=0, step=1, limit=6
  $region2: #{double_conv_pallas.1} parent=0 // loop_pre_header
    _
  $region3: #{double_conv_pallas.1} parent=0 // loop_header
    %s13 = sphi 0, %s17
    %p14 = scmp.ge.s32.totalorder %s13, 6
    %s20 = sphi 0, %s32
    %s21 = sphi 0, %s28
    %s22 = sphi 0, %s20
    %s23 = sphi 0, %s21
    %s24 = sphi 0, %s22
    %s25 = sphi 0, %s23
    %s37 = sphi 0, %s39
    %s40 = sphi 0, %s37
    %s41 = sphi 0, %s40
    %s57 = sphi 0, %s41
    %s71 = sphi 0, %s73
    %s74 = sphi 0, %s71
    %s75 = sphi 0, %s74
    %s91 = sphi 0, %s75
    %s105 = sphi 0, %s107
    %s108 = sphi 0, %s105
    %s109 = sphi 0, %s108
    %s125 = sphi 0, %s109
    %s129 = sphi 0, %s129
    %s131 = sphi 0, %s129
    %s132 = sphi 0, %s131
    %s146 = sphi 0, %s132
    %s150 = sphi 0, %s150
    %s152 = sphi 0, %s150
    %s153 = sphi 0, %s152
    %s167 = sphi 0, %s153
    %s171 = sphi 0, %s171
    %s173 = sphi 0, %s171
    %s174 = sphi 0, %s173
    %s188 = sphi 0, %s174
    %s192 = sphi 0, %s192
    %s194 = sphi 0, %s192
    %s195 = sphi 0, %s194
    %s209 = sphi 0, %s195
    %s217 = sphi 0, %s219
    %s220 = sphi 0, %s217
    %s221 = sphi 0, %s220
    %s237 = sphi 0, %s221
  $region4: #{double_conv_pallas.1} parent=0 // loop_header_branch
    %16 = sbr.rel (%p14) target = $region8
  $region5: #{double_conv_pallas.1} parent=0 // loop_body
    %s18 = ssub.s32 %s13, 1
    %s19 = ssub.s32 %s13, 2
    %s26 = sadd.s32 1, %s21
    %p27 = scmp.ge.s32.totalorder %s26, 2
    %s28 = scalar_select %p27, 0, %s26
    %s29 = sadd.s32 1, %s20
    %s30 = scalar_select %p27, %s29, %s20
    %p31 = scmp.ge.s32.totalorder %s30, 2
    %s32 = scalar_select %p31, 0, %s30
    %s33 = ssub.s32 %s20, %s32
    %s34 = ssub.s32 %s21, %s28
    %s35 = sor.u32 %s33, %s34
    %p36 = scmp.eq.s32.totalorder %s35, 0
    %s38 = sadd.s32 %s37, 1
    %s39 = scalar_select %p36, %s37, %s38
    %p42 = pneg %p36
    %p43 = scmp.eq.s32.totalorder %s13, 3
    %p44 = por %p42, %p43
    %p45 = scmp.ne.s32.totalorder %s37, %s40
    %p46 = scmp.eq.s32.totalorder %s13, 0
    %p47 = por %p45, %p46
    %p48 = scmp.ne.s32.totalorder %s37, %s40
    %p49 = scmp.eq.s32.totalorder %s18, 3
    %p50 = por %p48, %p49
    %p51 = scmp.ne.s32.totalorder %s40, %s41
    %p52 = scmp.eq.s32.totalorder %s18, 0
    %p53 = por %p51, %p52
    %p54 = scmp.ne.s32.totalorder %s40, %s41
    %p55 = scmp.eq.s32.totalorder %s19, 3
    %p56 = por %p54, %p55
    %p58 = scmp.ne.s32.totalorder %s41, %s57
    %p59 = scmp.eq.s32.totalorder %s19, 0
    %p60 = por %p58, %p59
    %s61 = ssub.s32 %s21, 1
    %p62 = scmp.gt.s32.totalorder %s61, 0
    %s63 = scalar_select %p62, %s61, 0
    %s64 = ssub.s32 %s28, 1
    %p65 = scmp.gt.s32.totalorder %s64, 0
    %s66 = scalar_select %p65, %s64, 0
    %s67 = ssub.s32 %s20, %s32
    %s68 = ssub.s32 %s63, %s66
    %s69 = sor.u32 %s67, %s68
    %p70 = scmp.eq.s32.totalorder %s69, 0
    %s72 = sadd.s32 %s71, 1
    %s73 = scalar_select %p70, %s71, %s72
    %p76 = pneg %p70
    %p77 = scmp.eq.s32.totalorder %s13, 3
    %p78 = por %p76, %p77
    %p79 = scmp.ne.s32.totalorder %s71, %s74
    %p80 = scmp.eq.s32.totalorder %s13, 0
    %p81 = por %p79, %p80
    %p82 = scmp.ne.s32.totalorder %s71, %s74
    %p83 = scmp.eq.s32.totalorder %s18, 3
    %p84 = por %p82, %p83
    %p85 = scmp.ne.s32.totalorder %s74, %s75
    %p86 = scmp.eq.s32.totalorder %s18, 0
    %p87 = por %p85, %p86
    %p88 = scmp.ne.s32.totalorder %s74, %s75
    %p89 = scmp.eq.s32.totalorder %s19, 3
    %p90 = por %p88, %p89
    %p92 = scmp.ne.s32.totalorder %s75, %s91
    %p93 = scmp.eq.s32.totalorder %s19, 0
    %p94 = por %p92, %p93
    %s95 = sadd.s32 %s21, 1
    %p96 = scmp.lt.s32.totalorder %s95, 1
    %s97 = scalar_select %p96, %s95, 1
    %s98 = sadd.s32 %s28, 1
    %p99 = scmp.lt.s32.totalorder %s98, 1
    %s100 = scalar_select %p99, %s98, 1
    %s101 = ssub.s32 %s20, %s32
    %s102 = ssub.s32 %s97, %s100
    %s103 = sor.u32 %s101, %s102
    %p104 = scmp.eq.s32.totalorder %s103, 0
    %s106 = sadd.s32 %s105, 1
    %s107 = scalar_select %p104, %s105, %s106
    %p110 = pneg %p104
    %p111 = scmp.eq.s32.totalorder %s13, 3
    %p112 = por %p110, %p111
    %p113 = scmp.ne.s32.totalorder %s105, %s108
    %p114 = scmp.eq.s32.totalorder %s13, 0
    %p115 = por %p113, %p114
    %p116 = scmp.ne.s32.totalorder %s105, %s108
    %p117 = scmp.eq.s32.totalorder %s18, 3
    %p118 = por %p116, %p117
    %p119 = scmp.ne.s32.totalorder %s108, %s109
    %p120 = scmp.eq.s32.totalorder %s18, 0
    %p121 = por %p119, %p120
    %p122 = scmp.ne.s32.totalorder %s108, %s109
    %p123 = scmp.eq.s32.totalorder %s19, 3
    %p124 = por %p122, %p123
    %p126 = scmp.ne.s32.totalorder %s109, %s125
    %p127 = scmp.eq.s32.totalorder %s19, 0
    %p128 = por %p126, %p127
    %s130 = sadd.s32 %s129, 1
    %p133 = scmp.eq.s32.totalorder %s13, 3
    %p134 = scmp.ne.s32.totalorder %s129, %s131
    %p135 = scmp.eq.s32.totalorder %s13, 0
    %p136 = por %p134, %p135
    %p137 = scmp.ne.s32.totalorder %s129, %s131
    %p138 = scmp.eq.s32.totalorder %s18, 3
    %p139 = por %p137, %p138
    %p140 = scmp.ne.s32.totalorder %s131, %s132
    %p141 = scmp.eq.s32.totalorder %s18, 0
    %p142 = por %p140, %p141
    %p143 = scmp.ne.s32.totalorder %s131, %s132
    %p144 = scmp.eq.s32.totalorder %s19, 3
    %p145 = por %p143, %p144
    %p147 = scmp.ne.s32.totalorder %s132, %s146
    %p148 = scmp.eq.s32.totalorder %s19, 0
    %p149 = por %p147, %p148
    %s151 = sadd.s32 %s150, 1
    %p154 = scmp.eq.s32.totalorder %s13, 3
    %p155 = scmp.ne.s32.totalorder %s150, %s152
    %p156 = scmp.eq.s32.totalorder %s13, 0
    %p157 = por %p155, %p156
    %p158 = scmp.ne.s32.totalorder %s150, %s152
    %p159 = scmp.eq.s32.totalorder %s18, 3
    %p160 = por %p158, %p159
    %p161 = scmp.ne.s32.totalorder %s152, %s153
    %p162 = scmp.eq.s32.totalorder %s18, 0
    %p163 = por %p161, %p162
    %p164 = scmp.ne.s32.totalorder %s152, %s153
    %p165 = scmp.eq.s32.totalorder %s19, 3
    %p166 = por %p164, %p165
    %p168 = scmp.ne.s32.totalorder %s153, %s167
    %p169 = scmp.eq.s32.totalorder %s19, 0
    %p170 = por %p168, %p169
    %s172 = sadd.s32 %s171, 1
    %p175 = scmp.eq.s32.totalorder %s13, 3
    %p176 = scmp.ne.s32.totalorder %s171, %s173
    %p177 = scmp.eq.s32.totalorder %s13, 0
    %p178 = por %p176, %p177
    %p179 = scmp.ne.s32.totalorder %s171, %s173
    %p180 = scmp.eq.s32.totalorder %s18, 3
    %p181 = por %p179, %p180
    %p182 = scmp.ne.s32.totalorder %s173, %s174
    %p183 = scmp.eq.s32.totalorder %s18, 0
    %p184 = por %p182, %p183
    %p185 = scmp.ne.s32.totalorder %s173, %s174
    %p186 = scmp.eq.s32.totalorder %s19, 3
    %p187 = por %p185, %p186
    %p189 = scmp.ne.s32.totalorder %s174, %s188
    %p190 = scmp.eq.s32.totalorder %s19, 0
    %p191 = por %p189, %p190
    %s193 = sadd.s32 %s192, 1
    %p196 = scmp.eq.s32.totalorder %s13, 3
    %p197 = scmp.ne.s32.totalorder %s192, %s194
    %p198 = scmp.eq.s32.totalorder %s13, 0
    %p199 = por %p197, %p198
    %p200 = scmp.ne.s32.totalorder %s192, %s194
    %p201 = scmp.eq.s32.totalorder %s18, 3
    %p202 = por %p200, %p201
    %p203 = scmp.ne.s32.totalorder %s194, %s195
    %p204 = scmp.eq.s32.totalorder %s18, 0
    %p205 = por %p203, %p204
    %p206 = scmp.ne.s32.totalorder %s194, %s195
    %p207 = scmp.eq.s32.totalorder %s19, 3
    %p208 = por %p206, %p207
    %p210 = scmp.ne.s32.totalorder %s195, %s209
    %p211 = scmp.eq.s32.totalorder %s19, 0
    %p212 = por %p210, %p211
    %s213 = ssub.s32 %s20, %s32
    %s214 = ssub.s32 %s21, %s28
    %s215 = sor.u32 %s213, %s214
    %p216 = scmp.eq.s32.totalorder %s215, 0
    %s218 = sadd.s32 %s217, 1
    %s219 = scalar_select %p216, %s217, %s218
    %p222 = pneg %p216
    %p223 = scmp.eq.s32.totalorder %s13, 3
    %p224 = por %p222, %p223
    %p225 = scmp.ne.s32.totalorder %s217, %s220
    %p226 = scmp.eq.s32.totalorder %s13, 0
    %p227 = por %p225, %p226
    %p228 = scmp.ne.s32.totalorder %s217, %s220
    %p229 = scmp.eq.s32.totalorder %s18, 3
    %p230 = por %p228, %p229
    %p231 = scmp.ne.s32.totalorder %s220, %s221
    %p232 = scmp.eq.s32.totalorder %s18, 0
    %p233 = por %p231, %p232
    %p234 = scmp.ne.s32.totalorder %s220, %s221
    %p235 = scmp.eq.s32.totalorder %s19, 3
    %p236 = por %p234, %p235
    %p238 = scmp.ne.s32.totalorder %s221, %s237
    %p239 = scmp.eq.s32.totalorder %s19, 0
    %p240 = por %p238, %p239
    %p241 = scmp.le.s32.totalorder 1, %s13
    %p242 = scmp.lt.s32.totalorder %s13, 5
    %p243 = pnand %p241, %p242
    %p244 = pneg %p243
    // Predicated region
    $region9: #{double_conv_pallas.1} parent=5 // pred_check
      _
    $region10: #{double_conv_pallas.1} parent=5 // pred_check_branch
      %246 = sbr.rel (%p243) target = $region12
    $region11: #{double_conv_pallas.1} parent=5 // pred_region
      %s247 = ssub.s32 %s13, 1
      // Predicated region
      $region13: #{double_conv_pallas.1} parent=11 // pred_check
        %p248 = pneg %p142
      $region14: #{double_conv_pallas.1} parent=11 // pred_check_branch
        %250 = sbr.rel (%p248) target = $region16
      $region15: #{double_conv_pallas.1} parent=11 // pred_region
        _
      $region16: #{double_conv_pallas.1} parent=11 // pred_fallthru
        _
      // Predicated region
      $region17: #{double_conv_pallas.1} parent=11 // pred_check
        %p251 = pneg %p163
      $region18: #{double_conv_pallas.1} parent=11 // pred_check_branch
        %253 = sbr.rel (%p251) target = $region20
      $region19: #{double_conv_pallas.1} parent=11 // pred_region
        _
      $region20: #{double_conv_pallas.1} parent=11 // pred_fallthru
        _
      // Predicated region
      $region21: #{double_conv_pallas.1} parent=11 // pred_check
        %p254 = pneg %p184
      $region22: #{double_conv_pallas.1} parent=11 // pred_check_branch
        %256 = sbr.rel (%p254) target = $region24
      $region23: #{double_conv_pallas.1} parent=11 // pred_region
        _
      $region24: #{double_conv_pallas.1} parent=11 // pred_fallthru
        _
      // Predicated region
      $region25: #{double_conv_pallas.1} parent=11 // pred_check
        %p257 = pneg %p205
      $region26: #{double_conv_pallas.1} parent=11 // pred_check_branch
        %259 = sbr.rel (%p257) target = $region28
      $region27: #{double_conv_pallas.1} parent=11 // pred_region
        _
      $region28: #{double_conv_pallas.1} parent=11 // pred_fallthru
        _
    $region12: #{double_conv_pallas.1} parent=5 // pred_fallthru
      _
    %p260 = scmp.lt.s32.totalorder %s13, 4
    // Predicated region
    $region29: #{double_conv_pallas.1} parent=5 // pred_check
      %p261 = pneg %p260
    $region30: #{double_conv_pallas.1} parent=5 // pred_check_branch
      %263 = sbr.rel (%p261) target = $region32
    $region31: #{double_conv_pallas.1} parent=5 // pred_region
      // Predicated region
      $region33: #{double_conv_pallas.1} parent=31 // pred_check
        %p264 = pneg %p47
      $region34: #{double_conv_pallas.1} parent=31 // pred_check_branch
        %266 = sbr.rel (%p264) target = $region36
      $region35: #{double_conv_pallas.1} parent=31 // pred_region
        %p267 = scmp.lt.s32.totalorder %s20, 1
        %s268 = scalar_select %p267, %s20, 1
        %p269 = scmp.lt.s32.totalorder %s21, 1
        %s270 = scalar_select %p269, %s21, 1
        %s271 = smul.addr %s268, 2
        %s272 = sadd.s32 %s270, %s271
        %s273 = smul.addr %s272, 8
        %s274 = scalar_lea.vmem %s0, %s273
      $region36: #{double_conv_pallas.1} parent=31 // pred_fallthru
        _
      // Predicated region
      $region37: #{double_conv_pallas.1} parent=31 // pred_check
        %p275 = pneg %p81
      $region38: #{double_conv_pallas.1} parent=31 // pred_check_branch
        %277 = sbr.rel (%p275) target = $region40
      $region39: #{double_conv_pallas.1} parent=31 // pred_region
        %s278 = ssub.s32 %s21, 1
        %p279 = scmp.gt.s32.totalorder %s278, 0
        %s280 = scalar_select %p279, %s278, 0
        %p281 = scmp.lt.s32.totalorder %s20, 1
        %s282 = scalar_select %p281, %s20, 1
        %p283 = scmp.lt.s32.totalorder %s280, 1
        %s284 = scalar_select %p283, %s280, 1
        %s285 = smul.addr %s282, 2
        %s286 = sadd.s32 %s284, %s285
        %s287 = smul.addr %s286, 8
        %s288 = scalar_lea.vmem %s1, %s287
        %s289 = ssub.s32 %s21, 1
        %p290 = scmp.gt.s32.totalorder %s289, 0
        %s291 = scalar_select %p290, %s289, 0
      $region40: #{double_conv_pallas.1} parent=31 // pred_fallthru
        _
      // Predicated region
      $region41: #{double_conv_pallas.1} parent=31 // pred_check
        %p292 = pneg %p115
      $region42: #{double_conv_pallas.1} parent=31 // pred_check_branch
        %294 = sbr.rel (%p292) target = $region44
      $region43: #{double_conv_pallas.1} parent=31 // pred_region
        %s295 = sadd.s32 %s21, 1
        %p296 = scmp.lt.s32.totalorder %s295, 1
        %s297 = scalar_select %p296, %s295, 1
        %p298 = scmp.lt.s32.totalorder %s20, 1
        %s299 = scalar_select %p298, %s20, 1
        %p300 = scmp.lt.s32.totalorder %s297, 1
        %s301 = scalar_select %p300, %s297, 1
        %s302 = smul.addr %s299, 2
        %s303 = sadd.s32 %s301, %s302
        %s304 = smul.addr %s303, 8
        %s305 = scalar_lea.vmem %s2, %s304
        %s306 = sadd.s32 %s21, 1
        %p307 = scmp.lt.s32.totalorder %s306, 1
        %s308 = scalar_select %p307, %s306, 1
      $region44: #{double_conv_pallas.1} parent=31 // pred_fallthru
        _
    $region32: #{double_conv_pallas.1} parent=5 // pred_fallthru
      _
    %p309 = scmp.le.s32.totalorder 1, %s13
    %p310 = scmp.lt.s32.totalorder %s13, 5
    %p311 = pnand %p309, %p310
    %p312 = pneg %p311
    // Predicated region
    $region45: #{double_conv_pallas.1} parent=5 // pred_check
      _
    $region46: #{double_conv_pallas.1} parent=5 // pred_check_branch
      %314 = sbr.rel (%p311) target = $region48
    $region47: #{double_conv_pallas.1} parent=5 // pred_region
      %s315 = ssub.s32 %s13, 1
      %p316 = scmp.lt.s32.totalorder %s22, 1
      %s317 = scalar_select %p316, %s22, 1
      %p318 = scmp.lt.s32.totalorder %s23, 1
      %s319 = scalar_select %p318, %s23, 1
      %s320 = smul.addr %s317, 2
      %s321 = sadd.s32 %s319, %s320
      %s322 = smul.addr %s321, 8
      %s323 = scalar_lea.vmem %s0, %s322
      %p324 = pneg %p53
      %p325 = pneg %p50
      %s326 = ssub.s32 %s23, 1
      %p327 = scmp.gt.s32.totalorder %s326, 0
      %s328 = scalar_select %p327, %s326, 0
      %p329 = scmp.lt.s32.totalorder %s22, 1
      %s330 = scalar_select %p329, %s22, 1
      %p331 = scmp.lt.s32.totalorder %s328, 1
      %s332 = scalar_select %p331, %s328, 1
      %s333 = smul.addr %s330, 2
      %s334 = sadd.s32 %s332, %s333
      %s335 = smul.addr %s334, 8
      %s336 = scalar_lea.vmem %s1, %s335
      %p337 = pneg %p87
      %p338 = pneg %p84
      %s339 = sadd.s32 %s23, 1
      %p340 = scmp.lt.s32.totalorder %s339, 1
      %s341 = scalar_select %p340, %s339, 1
      %p342 = scmp.lt.s32.totalorder %s22, 1
      %s343 = scalar_select %p342, %s22, 1
      %p344 = scmp.lt.s32.totalorder %s341, 1
      %s345 = scalar_select %p344, %s341, 1
      %s346 = smul.addr %s343, 2
      %s347 = sadd.s32 %s345, %s346
      %s348 = smul.addr %s347, 8
      %s349 = scalar_lea.vmem %s2, %s348
      %p350 = pneg %p121
      %p351 = pneg %p118
      %p352 = pneg %p142
      %p353 = pneg %p139
      %p354 = pneg %p163
      %p355 = pneg %p160
      %p356 = pneg %p184
      %p357 = pneg %p181
      %p358 = pneg %p205
      %p359 = pneg %p202
      %p360 = pneg %p233
      %p361 = pneg %p230
      %p362 = scmp.lt.s32.totalorder %s22, 1
      %s363 = scalar_select %p362, %s22, 1
      %p364 = scmp.lt.s32.totalorder %s23, 1
      %s365 = scalar_select %p364, %s23, 1
      %s366 = smul.addr %s363, 2
      %s367 = sadd.s32 %s365, %s366
      %s368 = smul.addr %s367, 8
      %s369 = scalar_lea.vmem %s7, %s368
      %p370 = scmp.lt.s32.totalorder %s22, 1
      %s371 = scalar_select %p370, %s22, 1
      %p372 = scmp.lt.s32.totalorder %s23, 1
      %s373 = scalar_select %p372, %s23, 1
      %s374 = smul.addr %s371, 2
      %s375 = sadd.s32 %s373, %s374
      %s376 = smul.addr %s375, 8
      %s377 = scalar_lea.vmem %s0, %s376
      %s378 = ssub.s32 %s23, 1
      %p379 = scmp.gt.s32.totalorder %s378, 0
      %s380 = scalar_select %p379, %s378, 0
      %p381 = scmp.lt.s32.totalorder %s22, 1
      %s382 = scalar_select %p381, %s22, 1
      %p383 = scmp.lt.s32.totalorder %s380, 1
      %s384 = scalar_select %p383, %s380, 1
      %s385 = smul.addr %s382, 2
      %s386 = sadd.s32 %s384, %s385
      %s387 = smul.addr %s386, 8
      %s388 = scalar_lea.vmem %s1, %s387
      %s389 = ssub.s32 %s23, 1
      %p390 = scmp.gt.s32.totalorder %s389, 0
      %s391 = scalar_select %p390, %s389, 0
      %s392 = sadd.s32 %s23, 1
      %p393 = scmp.lt.s32.totalorder %s392, 1
      %s394 = scalar_select %p393, %s392, 1
      %p395 = scmp.lt.s32.totalorder %s22, 1
      %s396 = scalar_select %p395, %s22, 1
      %p397 = scmp.lt.s32.totalorder %s394, 1
      %s398 = scalar_select %p397, %s394, 1
      %s399 = smul.addr %s396, 2
      %s400 = sadd.s32 %s398, %s399
      %s401 = smul.addr %s400, 8
      %s402 = scalar_lea.vmem %s2, %s401
      %s403 = sadd.s32 %s23, 1
      %p404 = scmp.lt.s32.totalorder %s403, 1
      %s405 = scalar_select %p404, %s403, 1
      %p406 = scmp.lt.s32.totalorder %s22, 1
      %s407 = scalar_select %p406, %s22, 1
      %p408 = scmp.lt.s32.totalorder %s23, 1
      %s409 = scalar_select %p408, %s23, 1
      %s410 = smul.addr %s407, 2
      %s411 = sadd.s32 %s409, %s410
      %s412 = smul.addr %s411, 8
      %s413 = scalar_lea.vmem %s7, %s412
      %p415 = scmp.gt.s32.totalorder %s23, 0
      %s416 = scalar_select %p415, 1, 0
      %s417 = scvt.s32.f32 %s416
      %p418 = scmp.lt.s32.totalorder %s23, 1
      %s419 = scalar_select %p418, 1, 0
      %s420 = scvt.s32.f32 %s419
      %v421 = vld [vmem:[%s388 + $0x6] sm:$0x3]
      %v422 = vstv %s417
      %v423 = vmul.f32 %v421, %v422
      %v424 = vld [vmem:[%s402] sm:$0x3]
      %v425 = vstv %s420
      %v426 = vmul.f32 %v424, %v425
      %v427 = vld [vmem:[%s377] sm:$0xff]
      %v429 = vrot.slane %v427, 6
      %v432 = vrot.slane %v426, 6
      %vm434 = vcmask 1041408
      %v435 = vsel %vm434, %v423, %v429
      %v436 = vsel %vm434, %v429, %v432
      %v437 = vpack.c.bf16 %v435, %v435
      %v438 = vpack.c.bf16 %v436, %v436
      %v441 = vunpack.c.l.b16 %v437
      %v442 = vunpack.c.l.b16 %v438
      %v443 = vpack.c.b16 %v442, %v441
      %v445 = vshrl.u32 %v443, 16
      %v447 = vshll.u32 %v443, 16
      %v449 = vrot.slane %v447, 1
      %v450 = vor.u32 %v445, %v449
      %451 = vrot.lane.b32.xlu0 %v450, 64
      %v452 = vpop.permute.xlu0 %451
      %v453 = vrot.slane %v443, 1
      %vm454 = vcmask 523264
      %v456 = vsel %vm454, %v443, %v452
      %v458 = vld [vmem:[%s3] sm:$0xf]
      %v459 = vld [vmem:[%s3 + $0x4] sm:$0xf]
      %v460 = vld [vmem:[%s3 + $0x8] sm:$0xf]
      %v461 = vld [vmem:[%s3 + $0xc] sm:$0xf]
      %v462 = vld [vmem:[%s3 + $0x10] sm:$0xf]
      %v463 = vld [vmem:[%s3 + $0x14] sm:$0xf]
      %v464 = vld [vmem:[%s3 + $0x18] sm:$0xf]
      %v465 = vld [vmem:[%s3 + $0x1c] sm:$0xf]
      %v466 = vld [vmem:[%s3 + $0x20] sm:$0xf]
      %v467 = vld [vmem:[%s3 + $0x24] sm:$0xf]
      %v468 = vld [vmem:[%s3 + $0x28] sm:$0xf]
      %v469 = vld [vmem:[%s3 + $0x2c] sm:$0xf]
      %v470 = vld [vmem:[%s3 + $0x30] sm:$0xf]
      %v471 = vld [vmem:[%s3 + $0x34] sm:$0xf]
      %v472 = vld [vmem:[%s3 + $0x38] sm:$0xf]
      %v473 = vld [vmem:[%s3 + $0x3c] sm:$0xf]
      %v474 = vld [vmem:[%s3 + $0x40] sm:$0xf]
      %v475 = vld [vmem:[%s3 + $0x44] sm:$0xf]
      %v476 = vld [vmem:[%s3 + $0x48] sm:$0xf]
      %v477 = vld [vmem:[%s3 + $0x4c] sm:$0xf]
      %v478 = vld [vmem:[%s3 + $0x50] sm:$0xf]
      %v479 = vld [vmem:[%s3 + $0x54] sm:$0xf]
      %v480 = vld [vmem:[%s3 + $0x58] sm:$0xf]
      %v481 = vld [vmem:[%s3 + $0x5c] sm:$0xf]
      %v482 = vld [vmem:[%s4] sm:$0x1]
      %v484 = vperm.slane %v482, 0
      %v510 = vunpack.c.l.b16 %v458
      %v511 = vunpack.c.l.b16 %v459
      %v512 = vunpack.c.l.b16 %v460
      %v513 = vunpack.c.l.b16 %v461
      %v514 = vunpack.c.l.b16 %v462
      %v515 = vunpack.c.l.b16 %v463
      %v516 = vunpack.c.l.b16 %v464
      %v517 = vunpack.c.l.b16 %v465
      %v518 = vunpack.c.l.b16 %v466
      %v519 = vunpack.c.l.b16 %v467
      %v520 = vunpack.c.l.b16 %v468
      %v521 = vunpack.c.l.b16 %v469
      %v522 = vunpack.c.l.b16 %v470
      %v523 = vunpack.c.l.b16 %v471
      %v524 = vunpack.c.l.b16 %v472
      %v525 = vunpack.c.l.b16 %v473
      %v526 = vunpack.c.l.b16 %v474
      %v527 = vunpack.c.l.b16 %v475
      %v528 = vunpack.c.l.b16 %v476
      %v529 = vunpack.c.l.b16 %v477
      %v530 = vunpack.c.l.b16 %v478
      %v531 = vunpack.c.l.b16 %v479
      %v532 = vunpack.c.l.b16 %v480
      %v533 = vunpack.c.l.b16 %v481
      %v534 = vpack.c.b16 %v511, %v510
      %v535 = vpack.c.b16 %v513, %v512
      %v536 = vpack.c.b16 %v515, %v514
      %v537 = vpack.c.b16 %v517, %v516
      %v538 = vpack.c.b16 %v519, %v518
      %v539 = vpack.c.b16 %v521, %v520
      %v540 = vpack.c.b16 %v523, %v522
      %v541 = vpack.c.b16 %v525, %v524
      %v542 = vpack.c.b16 %v527, %v526
      %v543 = vpack.c.b16 %v529, %v528
      %v544 = vpack.c.b16 %v531, %v530
      %v545 = vpack.c.b16 %v533, %v532
      %v559 = vsel %vm454, %v453, 0
      %561 = vmatpush.bf16.msra.mxu0 %v541
      %562 = vmatpush.bf16.msra.mxu0 %v540
      %563 = vmatpush.bf16.msra.mxu0 %v539
      %564 = vmatpush.bf16.msra.mxu0 %v538
      %565 = vmatpush.bf16.msra.mxu0 %v537
      %566 = vmatpush.bf16.msra.mxu0 %v536
      %567 = vmatpush.bf16.msra.mxu0 %v535
      %568 = vmatpush.bf16.msra.mxu0 %v534
      %569 = vmatmul.bf16.gmra.mxu0 %v456
      %v570 = vpop.f32.mrf.mxu0
      %v571 = vadd.f32 %v484, %v570
      %v572 = vpop.f32.mrf.mxu0
      %v573 = vadd.f32 %v484, %v572
      %574 = vdwg.mxu0
      %575 = vmatpush.bf16.msra.mxu0 0
      %576 = vmatpush.bf16.msra.mxu0 0
      %577 = vmatpush.bf16.msra.mxu0 0
      %578 = vmatpush.bf16.msra.mxu0 0
      %579 = vmatpush.bf16.msra.mxu0 %v545
      %580 = vmatpush.bf16.msra.mxu0 %v544
      %581 = vmatpush.bf16.msra.mxu0 %v543
      %582 = vmatpush.bf16.msra.mxu0 %v542
      %583 = vmatmul.bf16.gmra.mxu0 %v559
      %v584 = vpop.f32.mrf.mxu0
      %v585 = vadd.f32 %v571, %v584
      %v586 = vpop.f32.mrf.mxu0
      %v587 = vadd.f32 %v573, %v586
      %588 = vdwg.mxu0
      %v589 = vmax.f32 %v585, 0.0
      %v590 = vmax.f32 %v587, 0.0
      %v591 = vmul.f32 %v589, %v422
      %v592 = vmul.f32 %v590, %v425
      %vm593 = vcmask 1040384
      %v594 = vsel %vm593, %v591, %v589
      %v595 = vsel %vm593, %v590, %v592
      %v596 = vpack.c.bf16 %v594, %v594
      %v597 = vpack.c.bf16 %v595, %v595
      %v600 = vunpack.c.l.b16 %v596
      %v601 = vunpack.c.l.b16 %v597
      %v602 = vpack.c.b16 %v601, %v600
      %v604 = vshrl.u32 %v602, 16
      %v606 = vshll.u32 %v602, 16
      %v608 = vrot.slane %v606, 1
      %v609 = vor.u32 %v604, %v608
      %v611 = vrot.slane %v602, 1
      %v613 = vld [vmem:[%s5] sm:$0xf]
      %v614 = vld [vmem:[%s5 + $0x4] sm:$0xf]
      %v615 = vld [vmem:[%s5 + $0x8] sm:$0xf]
      %v616 = vld [vmem:[%s5 + $0xc] sm:$0xf]
      %v617 = vld [vmem:[%s5 + $0x10] sm:$0xf]
      %v618 = vld [vmem:[%s5 + $0x14] sm:$0xf]
      %v619 = vld [vmem:[%s5 + $0x18] sm:$0xf]
      %v620 = vld [vmem:[%s5 + $0x1c] sm:$0xf]
      %v621 = vld [vmem:[%s5 + $0x20] sm:$0xf]
      %v622 = vld [vmem:[%s5 + $0x24] sm:$0xf]
      %v623 = vld [vmem:[%s5 + $0x28] sm:$0xf]
      %v624 = vld [vmem:[%s5 + $0x2c] sm:$0xf]
      %v625 = vld [vmem:[%s5 + $0x30] sm:$0xf]
      %v626 = vld [vmem:[%s5 + $0x34] sm:$0xf]
      %v627 = vld [vmem:[%s5 + $0x38] sm:$0xf]
      %v628 = vld [vmem:[%s5 + $0x3c] sm:$0xf]
      %v629 = vld [vmem:[%s5 + $0x40] sm:$0xf]
      %v630 = vld [vmem:[%s5 + $0x44] sm:$0xf]
      %v631 = vld [vmem:[%s5 + $0x48] sm:$0xf]
      %v632 = vld [vmem:[%s5 + $0x4c] sm:$0xf]
      %v633 = vld [vmem:[%s5 + $0x50] sm:$0xf]
      %v634 = vld [vmem:[%s5 + $0x54] sm:$0xf]
      %v635 = vld [vmem:[%s5 + $0x58] sm:$0xf]
      %v636 = vld [vmem:[%s5 + $0x5c] sm:$0xf]
      %v637 = vld [vmem:[%s5 + $0x60] sm:$0xf]
      %v638 = vld [vmem:[%s5 + $0x64] sm:$0xf]
      %v639 = vld [vmem:[%s5 + $0x68] sm:$0xf]
      %v640 = vld [vmem:[%s5 + $0x6c] sm:$0xf]
      %v641 = vld [vmem:[%s5 + $0x70] sm:$0xf]
      %v642 = vld [vmem:[%s5 + $0x74] sm:$0xf]
      %v643 = vld [vmem:[%s5 + $0x78] sm:$0xf]
      %v644 = vld [vmem:[%s5 + $0x7c] sm:$0xf]
      %v645 = vld [vmem:[%s5 + $0x80] sm:$0xf]
      %v646 = vld [vmem:[%s5 + $0x84] sm:$0xf]
      %v647 = vld [vmem:[%s5 + $0x88] sm:$0xf]
      %v648 = vld [vmem:[%s5 + $0x8c] sm:$0xf]
      %v649 = vld [vmem:[%s5 + $0x90] sm:$0xf]
      %v650 = vld [vmem:[%s5 + $0x94] sm:$0xf]
      %v651 = vld [vmem:[%s5 + $0x98] sm:$0xf]
      %v652 = vld [vmem:[%s5 + $0x9c] sm:$0xf]
      %v653 = vld [vmem:[%s5 + $0xa0] sm:$0xf]
      %v654 = vld [vmem:[%s5 + $0xa4] sm:$0xf]
      %v655 = vld [vmem:[%s5 + $0xa8] sm:$0xf]
      %v656 = vld [vmem:[%s5 + $0xac] sm:$0xf]
      %v657 = vld [vmem:[%s5 + $0xb0] sm:$0xf]
      %v658 = vld [vmem:[%s5 + $0xb4] sm:$0xf]
      %v659 = vld [vmem:[%s5 + $0xb8] sm:$0xf]
      %v660 = vld [vmem:[%s5 + $0xbc] sm:$0xf]
      %v661 = vld [vmem:[%s6] sm:$0x1]
      %v663 = vperm.slane %v661, 0
      %v713 = vunpack.c.l.b16 %v613
      %v714 = vunpack.c.l.b16 %v614
      %v715 = vunpack.c.l.b16 %v615
      %v716 = vunpack.c.l.b16 %v616
      %v717 = vunpack.c.l.b16 %v617
      %v718 = vunpack.c.l.b16 %v618
      %v719 = vunpack.c.l.b16 %v619
      %v720 = vunpack.c.l.b16 %v620
      %v721 = vunpack.c.l.b16 %v621
      %v722 = vunpack.c.l.b16 %v622
      %v723 = vunpack.c.l.b16 %v623
      %v724 = vunpack.c.l.b16 %v624
      %v725 = vunpack.c.l.b16 %v625
      %v726 = vunpack.c.l.b16 %v626
      %v727 = vunpack.c.l.b16 %v627
      %v728 = vunpack.c.l.b16 %v628
      %v729 = vunpack.c.l.b16 %v629
      %v730 = vunpack.c.l.b16 %v630
      %v731 = vunpack.c.l.b16 %v631
      %v732 = vunpack.c.l.b16 %v632
      %v733 = vunpack.c.l.b16 %v633
      %v734 = vunpack.c.l.b16 %v634
      %v735 = vunpack.c.l.b16 %v635
      %v736 = vunpack.c.l.b16 %v636
      %v737 = vunpack.c.l.b16 %v637
      %v738 = vunpack.c.l.b16 %v638
      %v739 = vunpack.c.l.b16 %v639
      %v740 = vunpack.c.l.b16 %v640
      %v741 = vunpack.c.l.b16 %v641
      %v742 = vunpack.c.l.b16 %v642
      %v743 = vunpack.c.l.b16 %v643
      %v744 = vunpack.c.l.b16 %v644
      %v745 = vunpack.c.l.b16 %v645
      %v746 = vunpack.c.l.b16 %v646
      %v747 = vunpack.c.l.b16 %v647
      %v748 = vunpack.c.l.b16 %v648
      %v749 = vunpack.c.l.b16 %v649
      %v750 = vunpack.c.l.b16 %v650
      %v751 = vunpack.c.l.b16 %v651
      %v752 = vunpack.c.l.b16 %v652
      %v753 = vunpack.c.l.b16 %v653
      %v754 = vunpack.c.l.b16 %v654
      %v755 = vunpack.c.l.b16 %v655
      %v756 = vunpack.c.l.b16 %v656
      %v757 = vunpack.c.l.b16 %v657
      %v758 = vunpack.c.l.b16 %v658
      %v759 = vunpack.c.l.b16 %v659
      %v760 = vunpack.c.l.b16 %v660
      %v761 = vpack.c.b16 %v714, %v713
      %v762 = vpack.c.b16 %v716, %v715
      %v763 = vpack.c.b16 %v718, %v717
      %v764 = vpack.c.b16 %v720, %v719
      %v765 = vpack.c.b16 %v722, %v721
      %v766 = vpack.c.b16 %v724, %v723
      %v767 = vpack.c.b16 %v726, %v725
      %v768 = vpack.c.b16 %v728, %v727
      %v769 = vpack.c.b16 %v730, %v729
      %v770 = vpack.c.b16 %v732, %v731
      %v771 = vpack.c.b16 %v734, %v733
      %v772 = vpack.c.b16 %v736, %v735
      %v773 = vpack.c.b16 %v738, %v737
      %v774 = vpack.c.b16 %v740, %v739
      %v775 = vpack.c.b16 %v742, %v741
      %v776 = vpack.c.b16 %v744, %v743
      %v777 = vpack.c.b16 %v746, %v745
      %v778 = vpack.c.b16 %v748, %v747
      %v779 = vpack.c.b16 %v750, %v749
      %v780 = vpack.c.b16 %v752, %v751
      %v781 = vpack.c.b16 %v754, %v753
      %v782 = vpack.c.b16 %v756, %v755
      %v783 = vpack.c.b16 %v758, %v757
      %v784 = vpack.c.b16 %v760, %v759
      %809 = vmatpush.bf16.msra.mxu0 %v768
      %810 = vmatpush.bf16.msra.mxu0 %v767
      %811 = vmatpush.bf16.msra.mxu0 %v766
      %812 = vmatpush.bf16.msra.mxu0 %v765
      %813 = vmatpush.bf16.msra.mxu0 %v764
      %814 = vmatpush.bf16.msra.mxu0 %v763
      %815 = vmatpush.bf16.msra.mxu0 %v762
      %816 = vmatpush.bf16.msra.mxu0 %v761
      %817 = vmatmul.bf16.gmra.mxu0 %v596
      %v818 = vpop.f32.mrf.mxu0
      %v819 = vadd.f32 %v663, %v818
      %v820 = vpop.f32.mrf.mxu0
      %821 = vdwg.mxu0
      %822 = vmatpush.bf16.msra.mxu0 %v776
      %823 = vmatpush.bf16.msra.mxu0 %v775
      %824 = vmatpush.bf16.msra.mxu0 %v774
      %825 = vmatpush.bf16.msra.mxu0 %v773
      %826 = vmatpush.bf16.msra.mxu0 %v772
      %827 = vmatpush.bf16.msra.mxu0 %v771
      %828 = vmatpush.bf16.msra.mxu0 %v770
      %829 = vmatpush.bf16.msra.mxu0 %v769
      %830 = vmatmul.bf16.gmra.mxu0 %v609
      %v831 = vpop.f32.mrf.mxu0
      %v832 = vadd.f32 %v819, %v831
      %v833 = vpop.f32.mrf.mxu0
      %834 = vdwg.mxu0
      %835 = vmatpush.bf16.msra.mxu0 %v784
      %836 = vmatpush.bf16.msra.mxu0 %v783
      %837 = vmatpush.bf16.msra.mxu0 %v782
      %838 = vmatpush.bf16.msra.mxu0 %v781
      %839 = vmatpush.bf16.msra.mxu0 %v780
      %840 = vmatpush.bf16.msra.mxu0 %v779
      %841 = vmatpush.bf16.msra.mxu0 %v778
      %842 = vmatpush.bf16.msra.mxu0 %v777
      %843 = vmatmul.bf16.gmra.mxu0 %v611
      %v844 = vpop.f32.mrf.mxu0
      %v845 = vadd.f32 %v832, %v844
      %v846 = vpop.f32.mrf.mxu0
      %847 = vdwg.mxu0
      %v848 = vmax.f32 %v845, 0.0
      %849 = vst [vmem:[%s413] sm:$0xff] %v848
      %p850 = scmp.lt.s32.totalorder %s22, 1
      %s851 = scalar_select %p850, %s22, 1
      %p852 = scmp.lt.s32.totalorder %s23, 1
      %s853 = scalar_select %p852, %s23, 1
      %s854 = smul.addr %s851, 2
      %s855 = sadd.s32 %s853, %s854
      %s856 = smul.addr %s855, 8
      %s857 = scalar_lea.vmem %s7, %s856
      // Predicated region
      $region49: #{double_conv_pallas.1} parent=47 // pred_check
        %p858 = pneg %p230
      $region50: #{double_conv_pallas.1} parent=47 // pred_check_branch
        %860 = sbr.rel (%p858) target = $region52
      $region51: #{double_conv_pallas.1} parent=47 // pred_region
        _
      $region52: #{double_conv_pallas.1} parent=47 // pred_fallthru
        _
    $region48: #{double_conv_pallas.1} parent=5 // pred_fallthru
      _
    %p861 = scmp.le.s32.totalorder 2, %s13
    // Predicated region
    $region53: #{double_conv_pallas.1} parent=5 // pred_check
      %p862 = pneg %p861
    $region54: #{double_conv_pallas.1} parent=5 // pred_check_branch
      %864 = sbr.rel (%p862) target = $region56
    $region55: #{double_conv_pallas.1} parent=5 // pred_region
      %s865 = ssub.s32 %s13, 2
      // Predicated region
      $region57: #{double_conv_pallas.1} parent=55 // pred_check
        %p866 = pneg %p236
      $region58: #{double_conv_pallas.1} parent=55 // pred_check_branch
        %868 = sbr.rel (%p866) target = $region60
      $region59: #{double_conv_pallas.1} parent=55 // pred_region
        %p869 = scmp.lt.s32.totalorder %s24, 1
        %s870 = scalar_select %p869, %s24, 1
        %p871 = scmp.lt.s32.totalorder %s25, 1
        %s872 = scalar_select %p871, %s25, 1
        %s873 = smul.addr %s870, 2
        %s874 = sadd.s32 %s872, %s873
        %s875 = smul.addr %s874, 8
        %s876 = scalar_lea.vmem %s7, %s875
      $region60: #{double_conv_pallas.1} parent=55 // pred_fallthru
        _
    $region56: #{double_conv_pallas.1} parent=5 // pred_fallthru
      _
  $region6: #{double_conv_pallas.1} parent=0 // loop_footer
    %s17 = sadd.s32 1, %s13
  $region7: #{double_conv_pallas.1} parent=0 // loop_footer_branch
    %12 = sbr.rel target = $region3
  $region8: #{double_conv_pallas.1} parent=0 // loop_exit
    _

</llo_original>
